<compile_context>
chip_gen: v6e
topology: v6e:2x2x1
jax: 0.10.0
libtpu: 0.0.40
codegen_flags: <defaults>
</compile_context>

<pallas_src>
import math
import jax
import jax.numpy as jnp
from jax.experimental import pallas as pl
from jax.experimental.pallas import tpu as pltpu


def _linear_bias_kernel(x_ref, w_ref, b_ref, o_ref):
    # y = x @ Wt + b : f32 MXU accumulation, f32 bias add, cast on store.
    acc = jnp.dot(x_ref[...], w_ref[...], preferred_element_type=jnp.float32)
    o_ref[...] = (acc + b_ref[...]).astype(o_ref.dtype)


def expand_dims_mlp(x, w, b, *, block_m=4096, compute_dtype=None, out_dtype=None):
    """ExpandDimsMLP forward: Linear(time_dim -> time_rep_dim) + Dropout(p=0).

    x: (B, time_dim)
    w: (time_rep_dim, time_dim)   -- same layout as nn.Linear.weight
    b: (time_rep_dim,)
    Returns (B, time_rep_dim) in out_dtype (default: x.dtype).
    """
    # TODO(synk): dropout_prob > 0 (training) would need a pltpu.prng_* mask
    # path; the module's default p=0 makes dropout the identity.
    B, D_in = x.shape
    D_out = w.shape[0]
    compute_dtype = x.dtype if compute_dtype is None else jnp.dtype(compute_dtype)
    out_dtype = x.dtype if out_dtype is None else jnp.dtype(out_dtype)

    wt = w.T.astype(compute_dtype)                        # (D_in, D_out), tiny
    # Lane-dense stores without output padding: pack 2 logical rows/physical row.
    pack = 2 if (B % 2 == 0 and D_out < 128) else 1
    if pack == 2:
        x_k = x.reshape(B // 2, 2 * D_in)                 # free contiguous reshape
        zero = jnp.zeros_like(wt)
        w_k = jnp.concatenate(
            [jnp.concatenate([wt, zero], axis=1),
             jnp.concatenate([zero, wt], axis=1)], axis=0)  # (2*D_in, 2*D_out)
        b_k = jnp.concatenate([b, b]).astype(jnp.float32).reshape(1, 2 * D_out)
    else:
        x_k = x
        w_k = wt
        b_k = b.astype(jnp.float32).reshape(1, D_out)
    if x_k.dtype != compute_dtype:
        x_k = x_k.astype(compute_dtype)

    rows, k_dim = x_k.shape
    n_dim = w_k.shape[1]

    # Batch tile: full-extent block for small batches (always legal), otherwise
    # a multiple-of-8 tile <= block_m; pl.cdiv grid handles the ragged last block.
    if rows <= block_m:
        tm = rows
    else:
        tm = max(8, (block_m // 8) * 8)
    grid = (pl.cdiv(rows, tm),)

    cost = pl.CostEstimate(
        flops=2 * B * D_in * D_out,
        transcendentals=0,
        bytes_accessed=(B * D_in * jnp.dtype(compute_dtype).itemsize
                        + k_dim * n_dim * jnp.dtype(compute_dtype).itemsize
                        + n_dim * 4
                        + B * D_out * jnp.dtype(out_dtype).itemsize),
    )

    out = pl.pallas_call(
        _linear_bias_kernel,
        out_shape=jax.ShapeDtypeStruct((rows, n_dim), out_dtype),
        grid_spec=pl.GridSpec(
            grid=grid,
            in_specs=[
                pl.BlockSpec((tm, k_dim), lambda i: (i, 0)),      # x tile
                pl.BlockSpec((k_dim, n_dim), lambda i: (0, 0)),   # weight (resident)
                pl.BlockSpec((1, n_dim), lambda i: (0, 0)),       # bias (resident)
            ],
            out_specs=pl.BlockSpec((tm, n_dim), lambda i: (i, 0)),
        ),
        compiler_params=pltpu.CompilerParams(
            dimension_semantics=("parallel",)),
        cost_estimate=cost,
    )(x_k, w_k, b_k)

    if pack == 2:
        out = out.reshape(B, D_out)   # free un-pack (contiguous)
    return out


def init_params(key, time_dim, time_rep_dim, dtype=jnp.float32):
    # Mirrors nn.Linear(time_dim, time_rep_dim) + xavier_uniform_(weight).
    k_w, k_b = jax.random.split(key)
    bound_w = math.sqrt(6.0 / (time_dim + time_rep_dim))
    w = jax.random.uniform(k_w, (time_rep_dim, time_dim), dtype,
                           minval=-bound_w, maxval=bound_w)
    bound_b = 1.0 / math.sqrt(time_dim)
    b = jax.random.uniform(k_b, (time_rep_dim,), dtype,
                           minval=-bound_b, maxval=bound_b)
    return w, b


if __name__ == "__main__":
    time_dim, time_rep_dim = 32, 64
    key = jax.random.PRNGKey(0)
    k_x, k_p = jax.random.split(key)
    w, b = init_params(k_p, time_dim, time_rep_dim)

    # Main case: even batch -> packed, lane-dense (128-wide) output path.
    batch = 8
    x = jax.random.normal(k_x, (batch, time_dim), jnp.float32)
    y = expand_dims_mlp(x, w, b)
    jax.block_until_ready(y)
    y_ref = x @ w.T + b            # dropout p=0 -> identity
    assert y.shape == (batch, time_rep_dim)
    assert jnp.allclose(y, y_ref, atol=1e-5, rtol=1e-5)

    # Multi-step grid with a ragged last block (exercises pl.cdiv tiling).
    x2 = jax.random.normal(jax.random.PRNGKey(1), (24, time_dim), jnp.float32)
    y2 = expand_dims_mlp(x2, w, b, block_m=8)
    jax.block_until_ready(y2)
    assert jnp.allclose(y2, x2 @ w.T + b, atol=1e-5, rtol=1e-5)

    # Odd batch -> unpacked fallback (block last dim == full array dim, no pad).
    x3 = jax.random.normal(jax.random.PRNGKey(2), (7, time_dim), jnp.float32)
    y3 = expand_dims_mlp(x3, w, b)
    jax.block_until_ready(y3)
    assert jnp.allclose(y3, x3 @ w.T + b, atol=1e-5, rtol=1e-5)

    # bf16 output path (halves the dominant store stream when acceptable).
    y_bf16 = expand_dims_mlp(x, w, b, out_dtype=jnp.bfloat16)
    jax.block_until_ready(y_bf16)
    assert jnp.allclose(y_bf16.astype(jnp.float32), y_ref, atol=5e-2, rtol=5e-2)

    print("KERNEL_OK")
</pallas_src>

<mosaic_0001>
module attributes {stable_mosaic.version = 11 : i64} {
  func.func @_linear_bias_kernel(%arg0: i32, %arg1: memref<4x64xf32, #tpu.memory_space<vmem>>, %arg2: memref<64x128xf32, #tpu.memory_space<vmem>>, %arg3: memref<1x128xf32, #tpu.memory_space<vmem>>, %arg4: memref<4x128xf32, #tpu.memory_space<vmem>>) attributes {dimension_semantics = [#tpu.dimension_semantics<parallel>], iteration_bounds = array<i64: 1>, scalar_prefetch = 0 : i64, scratch_operands = 0 : i64, tpu.core_type = #tpu.core_type<tc>, window_params = [{transform_indices = @transform_0, window_bounds = array<i64: 4, 64>}, {pipeline_mode = #tpu.pipeline_mode<synchronous>, transform_indices = @transform_1, window_bounds = array<i64: 64, 128>}, {pipeline_mode = #tpu.pipeline_mode<synchronous>, transform_indices = @transform_2, window_bounds = array<i64: 1, 128>}, {transform_indices = @transform_3, window_bounds = array<i64: 4, 128>}]} {
    %c0 = arith.constant 0 : index
    %c0_0 = arith.constant 0 : index
    %0 = vector.load %arg1[%c0, %c0_0] : memref<4x64xf32, #tpu.memory_space<vmem>>, vector<4x64xf32>
    %c0_1 = arith.constant 0 : index
    %c0_2 = arith.constant 0 : index
    %1 = vector.load %arg2[%c0_1, %c0_2] : memref<64x128xf32, #tpu.memory_space<vmem>>, vector<64x128xf32>
    %cst = arith.constant dense<0.000000e+00> : vector<4x128xf32>
    %2 = tpu.matmul %0, %1, %cst {dimension_numbers = #tpu.dot_dimension_numbers<[1], [0], [0], [1], [0, 0, 1, 1], [], []>} : vector<4x64xf32>, vector<64x128xf32>, vector<4x128xf32> -> vector<4x128xf32>
    %c0_3 = arith.constant 0 : index
    %c0_4 = arith.constant 0 : index
    %3 = vector.load %arg3[%c0_3, %c0_4] : memref<1x128xf32, #tpu.memory_space<vmem>>, vector<1x128xf32>
    %4 = vector.broadcast %3 : vector<1x128xf32> to vector<4x128xf32>
    %5 = arith.addf %2, %4 : vector<4x128xf32>
    %c0_5 = arith.constant 0 : index
    %c0_6 = arith.constant 0 : index
    %6 = vector.load %arg4[%c0_5, %c0_6] : memref<4x128xf32, #tpu.memory_space<vmem>>, vector<4x128xf32>
    tpu.vector_store %arg4[%c0_5, %c0_6], %5 {strides = array<i32>} : memref<4x128xf32, #tpu.memory_space<vmem>>, vector<4x128xf32>,
    return
  }
  func.func @transform_0(%arg0: i32) -> (i32, i32) {
    %c0_i32 = arith.constant 0 : i32
    %c0_i32_0 = arith.constant 0 : i32
    return %arg0, %c0_i32 : i32, i32
  }
  func.func @transform_1(%arg0: i32) -> (i32, i32) {
    %c0_i32 = arith.constant 0 : i32
    %c0_i32_0 = arith.constant 0 : i32
    %c0_i32_1 = arith.constant 0 : i32
    return %c0_i32, %c0_i32_0 : i32, i32
  }
  func.func @transform_2(%arg0: i32) -> (i32, i32) {
    %c0_i32 = arith.constant 0 : i32
    %c0_i32_0 = arith.constant 0 : i32
    %c0_i32_1 = arith.constant 0 : i32
    return %c0_i32, %c0_i32_0 : i32, i32
  }
  func.func @transform_3(%arg0: i32) -> (i32, i32) {
    %c0_i32 = arith.constant 0 : i32
    %c0_i32_0 = arith.constant 0 : i32
    return %arg0, %c0_i32 : i32, i32
  }
}

</mosaic_0001>

<llo_original>
// kernel: tpu_custom_call.1
$region0: #{tpu_custom_call.1}
  #allocation0 [shape = 'u32[]', space=smem, size = 0x4, offset = 0x4, fixed_abs, tag = 'smem constant byte address 0x4 - core index']
  #allocation1 [shape = 'u32[144,128]{1,0:T(1,128)}', space=vmem, size = 0x12000, scoped, tag = 'internal scratch']
  %s0 = inlined_call_operand.hbm [shape: f32[4,64], index: 0, kind: input, shape index: {}]
  %s1 = inlined_call_operand.hbm [shape: f32[64,128], index: 1, kind: input, shape index: {}]
  %s2 = inlined_call_operand.vmem [shape: f32[1,128], index: 2, kind: input, shape index: {}]
  %s3 = inlined_call_operand.hbm [shape: f32[4,128], index: 3, kind: output, shape index: {}]
  %s4 = sld [smem:[#allocation0]]
  $region30: #{tpu_custom_call.1} parent=0
    _
  %s6 = ssub.s32 1, %s4
  %s7 = scalar_select 0, %s6, %s4
  $region1: #{tpu_custom_call.1} parent=0
    #allocation2 [shape = 'u8[2048]{0}', space=vmem, size = 0x800, scoped, tag = 'input window, operand 0, single buffered']
    #allocation3 [shape = 's32[1]{0}', space=sflag, size = 0x4, scoped, tag = 'scoped memory for tpu_custom_call.1']
    #allocation4 [shape = 's32[1]{0}', space=sflag, size = 0x4, scoped, tag = 'scoped memory for tpu_custom_call.1']
    #allocation5 [shape = 'u8[32768]{0}', space=vmem, size = 0x8000, scoped, tag = 'input window, operand 1, single buffered']
    #allocation6 [shape = 's32[1]{0}', space=sflag, size = 0x4, scoped, tag = 'scoped memory for tpu_custom_call.1']
    #allocation7 [shape = 'u8[2048]{0}', space=vmem, size = 0x800, scoped, tag = 'output window, operand 0, single buffered']
    %8 = vsyncpa [#allocation3], 0
    %9 = vsyncpa [#allocation6], 0
    %10 = vsyncpa [#allocation4], 0
    // Predicated region
    $region2: #{tpu_custom_call.1} parent=1 // pred_check
      _
    $region3: #{tpu_custom_call.1} parent=1 // pred_check_branch
      %12 = sbr.rel (0) target = $region5
    $region4: #{tpu_custom_call.1} parent=1 // pred_region
      %s14 = ssub.s32 64, 64
      %15 = vsyncadd [#allocation3], %s14
      %s17 = sshll.u32 [#allocation2], 4
      %s18 = int_to_ptr.vmem [resolvable:$true] %s17
      %20 = dma.hbm_to_vmem [thread:$0]  %s0, 64, %s18, [#allocation3]
    $region5: #{tpu_custom_call.1} parent=1 // pred_fallthru
      _
    // Predicated region
    $region6: #{tpu_custom_call.1} parent=1 // pred_check
      _
    $region7: #{tpu_custom_call.1} parent=1 // pred_check_branch
      %22 = sbr.rel (0) target = $region9
    $region8: #{tpu_custom_call.1} parent=1 // pred_region
      %s24 = ssub.s32 1024, 1024
      %25 = vsyncadd [#allocation6], %s24
      %s26 = sshll.u32 [#allocation5], 4
      %s27 = int_to_ptr.vmem [resolvable:$true] %s26
      %32 = dma.hbm_to_vmem [thread:$0]  %s1, 1024, %s27, [#allocation6], 128, 128, 8
    $region9: #{tpu_custom_call.1} parent=1 // pred_fallthru
      _
    // Predicated region
    $region10: #{tpu_custom_call.1} parent=1 // pred_check
      _
    $region11: #{tpu_custom_call.1} parent=1 // pred_check_branch
      %34 = sbr.rel (0) target = $region13
    $region12: #{tpu_custom_call.1} parent=1 // pred_region
      _
    $region13: #{tpu_custom_call.1} parent=1 // pred_fallthru
      _
    // Predicated region
    $region14: #{tpu_custom_call.1} parent=1 // pred_check
      _
    $region15: #{tpu_custom_call.1} parent=1 // pred_check_branch
      %36 = sbr.rel (0) target = $region17
    $region16: #{tpu_custom_call.1} parent=1 // pred_region
      %37 = dma.done [#allocation3], 64
    $region17: #{tpu_custom_call.1} parent=1 // pred_fallthru
      _
    // Predicated region
    $region18: #{tpu_custom_call.1} parent=1 // pred_check
      _
    $region19: #{tpu_custom_call.1} parent=1 // pred_check_branch
      %39 = sbr.rel (0) target = $region21
    $region20: #{tpu_custom_call.1} parent=1 // pred_region
      %40 = dma.done [#allocation6], 1024
    $region21: #{tpu_custom_call.1} parent=1 // pred_fallthru
      _
    %v41 = vld [vmem:[#allocation2] sm:$0xf]
    %v42 = vld [vmem:[#allocation5] sm:$0xff]
    %v43 = vld [vmem:[#allocation5 + $0x8] sm:$0xff]
    %v44 = vld [vmem:[#allocation5 + $0x10] sm:$0xff]
    %v45 = vld [vmem:[#allocation5 + $0x18] sm:$0xff]
    %v46 = vld [vmem:[#allocation5 + $0x20] sm:$0xff]
    %v47 = vld [vmem:[#allocation5 + $0x28] sm:$0xff]
    %v48 = vld [vmem:[#allocation5 + $0x30] sm:$0xff]
    %v49 = vld [vmem:[#allocation5 + $0x38] sm:$0xff]
    %v50 = vld [vmem:[%s2] sm:$0x1]
    %v52 = vlaneseq
    %v53 = vshrl.u32 %v52, 7
    %v54 = vsub.s32 0, %v53
    %v55 = vrot.slane %v50, %v54
    %vm57 = vcmask 523264
    %v59 = vsel %vm57, %v41, 0
    %61 = vmatprep.subr.mxu0 0.0
    %62 = vmatpush1.msra.mxu0 0.0
    %63 = vmatprep.subr.mxu0 0.0
    %64 = vmatpush1.msra.mxu0 0.0
    %65 = vmatprep.subr.mxu0 0.0
    %66 = vmatpush1.msra.mxu0 0.0
    %67 = vmatprep.subr.mxu0 0.0
    %68 = vmatpush1.msra.mxu0 0.0
    %69 = vmatprep.subr.mxu0 0.0
    %70 = vmatpush1.msra.mxu0 0.0
    %71 = vmatprep.subr.mxu0 0.0
    %72 = vmatpush1.msra.mxu0 0.0
    %73 = vmatprep.subr.mxu0 0.0
    %74 = vmatpush1.msra.mxu0 0.0
    %75 = vmatprep.subr.mxu0 0.0
    %76 = vmatpush1.msra.mxu0 0.0
    %77 = vmatprep.subr.mxu0 0.0
    %78 = vmatpush1.msra.mxu0 %v49
    %79 = vmatprep.subr.mxu0 0.0
    %80 = vmatpush1.msra.mxu0 %v48
    %81 = vmatprep.subr.mxu0 0.0
    %82 = vmatpush1.msra.mxu0 %v47
    %83 = vmatprep.subr.mxu0 0.0
    %84 = vmatpush1.msra.mxu0 %v46
    %85 = vmatprep.subr.mxu0 0.0
    %86 = vmatpush1.msra.mxu0 %v45
    %87 = vmatprep.subr.mxu0 0.0
    %88 = vmatpush1.msra.mxu0 %v44
    %89 = vmatprep.subr.mxu0 0.0
    %90 = vmatpush1.msra.mxu0 %v43
    %91 = vmatprep.subr.mxu0 0.0
    %92 = vmatpush1.msra.mxu0 %v42
    %93 = vmatprep.subr.mxu0 0.0
    %94 = vmatpush2.msra.mxu0 0.0
    %95 = vmatprep.subr.mxu0 0.0
    %96 = vmatpush2.msra.mxu0 0.0
    %97 = vmatprep.subr.mxu0 0.0
    %98 = vmatpush2.msra.mxu0 0.0
    %99 = vmatprep.subr.mxu0 0.0
    %100 = vmatpush2.msra.mxu0 0.0
    %101 = vmatprep.subr.mxu0 0.0
    %102 = vmatpush2.msra.mxu0 0.0
    %103 = vmatprep.subr.mxu0 0.0
    %104 = vmatpush2.msra.mxu0 0.0
    %105 = vmatprep.subr.mxu0 0.0
    %106 = vmatpush2.msra.mxu0 0.0
    %107 = vmatprep.subr.mxu0 0.0
    %108 = vmatpush2.msra.mxu0 0.0
    %109 = vmatprep.subr.mxu0 0.0
    %110 = vmatpush2.msra.mxu0 0.0
    %111 = vmatprep.subr.mxu0 0.0
    %112 = vmatpush2.msra.mxu0 0.0
    %113 = vmatprep.subr.mxu0 0.0
    %114 = vmatpush2.msra.mxu0 0.0
    %115 = vmatprep.subr.mxu0 0.0
    %116 = vmatpush2.msra.mxu0 0.0
    %117 = vmatprep.subr.mxu0 0.0
    %118 = vmatpush2.msra.mxu0 0.0
    %119 = vmatprep.subr.mxu0 0.0
    %120 = vmatpush2.msra.mxu0 0.0
    %121 = vmatprep.subr.mxu0 0.0
    %122 = vmatpush2.msra.mxu0 0.0
    %123 = vmatprep.subr.mxu0 0.0
    %124 = vmatpush2.msra.mxu0 0.0
    %125 = vmatprep.mubr.f32.mxu0 0.0
    %126 = vmatmul.mubr.f32.gmra.mxu0 %v59
    %v127 = vpop.f32.mrf.mxu0
    %v128 = vadd.f32 %v55, %v127
    %v129 = vpop.f32.mrf.mxu0
    %130 = vdwg.mxu0
    %131 = vst [vmem:[#allocation7] sm:$0xf] %v128
    // Predicated region
    $region22: #{tpu_custom_call.1} parent=1 // pred_check
      _
    $region23: #{tpu_custom_call.1} parent=1 // pred_check_branch
      %133 = sbr.rel (0) target = $region25
    $region24: #{tpu_custom_call.1} parent=1 // pred_region
      %s135 = ssub.s32 64, 64
      %136 = vsyncadd [#allocation4], %s135
      %s138 = sshll.u32 [#allocation7], 4
      %s139 = int_to_ptr.vmem [resolvable:$true] %s138
      %141 = dma.vmem_to_hbm [thread:$0]  %s139, 64, %s3, [#allocation4]
    $region25: #{tpu_custom_call.1} parent=1 // pred_fallthru
      _
    // Predicated region
    $region26: #{tpu_custom_call.1} parent=1 // pred_check
      _
    $region27: #{tpu_custom_call.1} parent=1 // pred_check_branch
      %143 = sbr.rel (0) target = $region29
    $region28: #{tpu_custom_call.1} parent=1 // pred_region
      %144 = dma.done [#allocation4], 64
    $region29: #{tpu_custom_call.1} parent=1 // pred_fallthru
      _
    %145 = vsyncpa [#allocation3], 1
    %146 = vsyncpa [#allocation6], 1
    %147 = vsyncpa [#allocation4], 1

</llo_original>
